<compile_context>
chip_gen: v7x
topology: tpu7x:2x2x1
jax: 0.10.0
libtpu: 0.0.40
codegen_flags: <defaults>
</compile_context>

<pallas_src>
import functools
import math

import jax
import jax.numpy as jnp
from jax import lax
from jax.experimental import pallas as pl
from jax.experimental.pallas import tpu as pltpu

# Explicit scoped-VMEM budget: above v5e's 16 MiB default, comfortably inside
# v7x's 64 MiB physical.  Byte-targeted tiles below keep the working set ~4-8 MiB.
_VMEM_LIMIT = 32 << 20


# --------------------------------------------------------------------------- #
# Phase 1: per-batch column mean over N  (grid = (batch, N-tiles), reduction).
# --------------------------------------------------------------------------- #
def _col_mean_kernel(x_ref, o_ref, acc_ref, *, n_rows, tile_rows, ragged):
    nt = pl.program_id(1)

    @pl.when(nt == 0)
    def _():
        acc_ref[...] = jnp.zeros_like(acc_ref)

    if ragged:
        is_last = nt == pl.num_programs(1) - 1

        # Non-last tiles: straight f32 sublane reduce (no iota/compare/select).
        @pl.when(jnp.logical_not(is_last))
        def _():
            acc_ref[...] += jnp.sum(x_ref[...], axis=0, keepdims=True,
                                    dtype=jnp.float32)

        # Last (ragged) tile only: select-mask rows past the true N so the
        # unspecified padding of the out-of-bounds block never biases the mean.
        @pl.when(is_last)
        def _():
            row0 = nt * tile_rows
            row_ids = lax.broadcasted_iota(jnp.int32, (tile_rows, 1), 0) + row0
            x = jnp.where(row_ids < n_rows, x_ref[...].astype(jnp.float32), 0.0)
            acc_ref[...] += jnp.sum(x, axis=0, keepdims=True)
    else:
        acc_ref[...] += jnp.sum(x_ref[...], axis=0, keepdims=True,
                                dtype=jnp.float32)

    @pl.when(nt == pl.num_programs(1) - 1)
    def _():
        o_ref[...] = acc_ref[...] * (1.0 / n_rows)       # true N, f32 output


# --------------------------------------------------------------------------- #
# Phase 2: replicate the per-batch row over all N rows (streaming write).
# --------------------------------------------------------------------------- #
def _bcast_rows_kernel(row_ref, o_ref, *, chunk_rows):
    rows, width = o_ref.shape
    # Hoisted once per grid step: a (chunk_rows, width) slab of the repeated row.
    chunk = jnp.broadcast_to(row_ref[...], (chunk_rows, width)).astype(o_ref.dtype)
    n_full = rows // chunk_rows
    tail = rows - n_full * chunk_rows
    if n_full == 1 and tail == 0:
        o_ref[...] = chunk
    else:
        if n_full > 0:
            @pl.loop(0, n_full)
            def _(c):
                start = pl.multiple_of(c * chunk_rows, chunk_rows)
                o_ref[pl.ds(start, chunk_rows), :] = chunk
        if tail:
            o_ref[pl.ds(n_full * chunk_rows, tail), :] = chunk[:tail, :]


def _row_tiles(num_rows, row_bytes, tile_bytes, chunk_bytes):
    """Pick (block_rows, chunk_rows) obeying the (8, lane) tiling rule."""
    if num_rows % 8 != 0:
        # Must use a full-extent block; single full store inside the kernel.
        return num_rows, num_rows
    chunk = min(num_rows, max(8, (chunk_bytes // max(row_bytes, 1)) // 8 * 8))
    block = min(num_rows,
                max(chunk, (tile_bytes // max(row_bytes, 1)) // chunk * chunk))
    return block, chunk


# --------------------------------------------------------------------------- #
# Wrapper
# --------------------------------------------------------------------------- #
def linear_transmission_layer(x, B, cT, *, tile_bytes=2 << 20, tile_n=None,
                              chunk_bytes=64 << 10):
    """x: (batch, N, F) or (N, F); B: (F, Fout); cT: (1, Fout) -> matching output."""
    if x.ndim == 2:
        return linear_transmission_layer(
            x[None], B, cT, tile_bytes=tile_bytes, tile_n=tile_n,
            chunk_bytes=chunk_bytes)[0]

    batch, N, F = x.shape
    Fout = B.shape[1]
    itemsize = jnp.dtype(x.dtype).itemsize

    # ---------------- phase 1: (batch, 1, F) column mean, f32 ----------------
    # Byte-targeted tile (~tile_bytes of X per grid step), multiple of 8 rows.
    tn = int(tile_n) if tile_n is not None else (tile_bytes // (F * itemsize)) // 8 * 8
    tn = max(8, min(N, tn))
    if tn >= N or tn % 8 != 0:
        tn = N                              # full-extent block
    n_tiles = pl.cdiv(N, tn)
    ragged = (N % tn) != 0

    mean = pl.pallas_call(
        functools.partial(_col_mean_kernel, n_rows=N, tile_rows=tn, ragged=ragged),
        out_shape=jax.ShapeDtypeStruct((batch, 1, F), jnp.float32),
        grid_spec=pltpu.PrefetchScalarGridSpec(
            num_scalar_prefetch=0,
            grid=(batch, n_tiles),
            in_specs=[pl.BlockSpec((None, tn, F), lambda b, k: (b, k, 0))],
            out_specs=pl.BlockSpec((None, 1, F), lambda b, k: (b, 0, 0)),
            scratch_shapes=[pltpu.VMEM((1, F), jnp.float32)]),
        compiler_params=pltpu.CompilerParams(
            dimension_semantics=("parallel", "arbitrary"),
            vmem_limit_bytes=_VMEM_LIMIT),
    )(x)
    # TODO(synk): for batch==1 on v7x, a 2-way split of the N reduction (extra
    # parallel grid axis producing partial sums) would use both TensorCores.

    # ----- tiny projection outside Pallas: keeps B/cT out of the VMEM budget -----
    row = jnp.matmul(mean, B.astype(jnp.float32), precision=lax.Precision.HIGHEST)
    row = (row + cT.astype(jnp.float32)).astype(x.dtype)        # (batch, 1, Fout)

    # TODO(synk): dropout / activation / spectral_norm are None in the module's
    # defaults and are not implemented here.
    # TODO(synk): if a downstream consumer can take (batch, 1, Fout) directly,
    # return `row` here and skip phase 2 entirely (removes the N x Fout HBM write).

    # ---------------- phase 2: replicate row over N (lane-dense write) ----------------
    reps = 128 // math.gcd(Fout, 128)        # smallest r with (r * Fout) % 128 == 0
    if reps > 1 and N % reps == 0:
        R, C = N // reps, Fout * reps        # view (N, Fout) as (R, C), C lane-dense
    else:
        reps, R, C = 1, N, Fout              # fallback: masked-lane stores
    row_slab = jnp.tile(row, (1, 1, reps))   # (batch, 1, C)

    tr, chunk = _row_tiles(R, C * itemsize, tile_bytes, chunk_bytes)
    n_row_tiles = pl.cdiv(R, tr)

    out = pl.pallas_call(
        functools.partial(_bcast_rows_kernel, chunk_rows=chunk),
        out_shape=jax.ShapeDtypeStruct((batch, R, C), x.dtype),
        grid_spec=pltpu.PrefetchScalarGridSpec(
            num_scalar_prefetch=0,
            grid=(batch, n_row_tiles),
            in_specs=[pl.BlockSpec((None, 1, C), lambda b, k: (b, 0, 0))],
            out_specs=pl.BlockSpec((None, tr, C), lambda b, k: (b, k, 0))),
        compiler_params=pltpu.CompilerParams(
            dimension_semantics=("parallel", "parallel"),
            vmem_limit_bytes=_VMEM_LIMIT),
    )(row_slab)
    return out.reshape(batch, N, Fout)


# --------------------------------------------------------------------------- #
# Pure-JAX reference of the literal PyTorch math.
# --------------------------------------------------------------------------- #
def _reference(x, B, cT):
    N = x.shape[-2]
    o1 = jnp.ones((N, 1), dtype=x.dtype)
    gram = o1 @ o1.T
    xb = (1.0 / N) * jnp.matmul(
        jnp.matmul(gram, x, precision=lax.Precision.HIGHEST),
        B, precision=lax.Precision.HIGHEST)
    return xb + o1 @ cT


if __name__ == "__main__":
    key = jax.random.PRNGKey(0)

    def init_params(k, fin, fout):
        kb, kc = jax.random.split(k)
        # reset_parameters(): kaiming_uniform_(B, a=sqrt(5)) with PyTorch fan_in =
        # B.size(1) = fout  =>  bound = 1/sqrt(fout); cT ~ U(-bound, bound).
        bound = 1.0 / math.sqrt(fout)
        Bp = jax.random.uniform(kb, (fin, fout), jnp.float32, -bound, bound)
        cTp = jax.random.uniform(kc, (1, fout), jnp.float32, -bound, bound)
        return Bp, cTp

    cases = [
        # (name, (batch, N, F), Fout, kwargs)
        ("default tiles, lane-dense bcast", (2, 40, 16), 32, {}),
        ("small tiles: ragged mean + tiled/chunked bcast", (2, 160, 16), 32,
         dict(tile_n=48, tile_bytes=8192, chunk_bytes=4096)),
        ("fallback bcast (Fout not lane-packable here)", (2, 20, 16), 48, {}),
    ]

    for name, (b, n, f), fout, kw in cases:
        k1, k2, key = jax.random.split(key, 3)
        Bp, cTp = init_params(k1, f, fout)
        x = jax.random.normal(k2, (b, n, f), jnp.float32)
        out = jax.block_until_ready(linear_transmission_layer(x, Bp, cTp, **kw))
        ref = _reference(x, Bp, cTp)
        assert out.shape == (b, n, fout), f"{name}: bad shape {out.shape}"
        assert jnp.allclose(out, ref, atol=1e-5, rtol=1e-4), f"{name}: mismatch"

    # 2-D (unbatched) input path, as supported by the torch module.
    k1, k2, key = jax.random.split(key, 3)
    Bp, cTp = init_params(k1, 16, 32)
    x2 = jax.random.normal(k2, (24, 16), jnp.float32)
    out2 = jax.block_until_ready(linear_transmission_layer(x2, Bp, cTp))
    ref2 = _reference(x2, Bp, cTp)
    assert out2.shape == (24, 32)
    assert jnp.allclose(out2, ref2, atol=1e-5, rtol=1e-4), "2-D path: mismatch"

    print("KERNEL_OK")
</pallas_src>

<mosaic_0001>
module attributes {stable_mosaic.version = 11 : i64} {
  func.func @_col_mean_kernel(%arg0: i32, %arg1: i32, %arg2: memref<1x40x16xf32, #tpu.memory_space<vmem>>, %arg3: memref<1x1x16xf32, #tpu.memory_space<vmem>>, %arg4: memref<1x16xf32, #tpu.memory_space<vmem>>) attributes {dimension_semantics = [#tpu.dimension_semantics<parallel>, #tpu.dimension_semantics<arbitrary>], iteration_bounds = array<i64: 2, 1>, scalar_prefetch = 0 : i64, scratch_operands = 1 : i64, tpu.core_type = #tpu.core_type<tc>, window_params = [{transform_indices = @transform_0, window_bounds = array<i64: 1, 40, 16>}, {transform_indices = @transform_1, window_bounds = array<i64: 1, 1, 16>}]} {
    %c0_i32 = arith.constant 0 : i32
    %0 = arith.cmpi eq, %arg1, %c0_i32 : i32
    %1 = arith.extui %0 : i1 to i32
    %c0_i32_0 = arith.constant 0 : i32
    %2 = arith.cmpi ne, %1, %c0_i32_0 : i32
    scf.if %2 {
      %cst_9 = arith.constant 0.000000e+00 : f32
      %13 = vector.broadcast %cst_9 : f32 to vector<1x16xf32>
      %c0_10 = arith.constant 0 : index
      %c0_11 = arith.constant 0 : index
      %14 = vector.load %arg4[%c0_10, %c0_11] : memref<1x16xf32, #tpu.memory_space<vmem>>, vector<1x16xf32>
      tpu.vector_store %arg4[%c0_10, %c0_11], %13 {strides = array<i32>} : memref<1x16xf32, #tpu.memory_space<vmem>>, vector<1x16xf32>,
    } else {
    }
    %c0 = arith.constant 0 : index
    %c0_1 = arith.constant 0 : index
    %3 = vector.load %arg4[%c0, %c0_1] : memref<1x16xf32, #tpu.memory_space<vmem>>, vector<1x16xf32>
    %c0_2 = arith.constant 0 : index
    %c0_3 = arith.constant 0 : index
    %c0_4 = arith.constant 0 : index
    %4 = vector.load %arg2[%c0_2, %c0_3, %c0_4] : memref<1x40x16xf32, #tpu.memory_space<vmem>>, vector<1x40x16xf32>
    %5 = vector.shape_cast %4 : vector<1x40x16xf32> to vector<40x16xf32>
    %cst = arith.constant dense<0.000000e+00> : vector<16xf32>
    %6 = vector.multi_reduction <add>, %5, %cst [0] : vector<40x16xf32> to vector<16xf32>
    %7 = vector.shape_cast %6 : vector<16xf32> to vector<1x16xf32>
    %8 = arith.addf %3, %7 : vector<1x16xf32>
    %c0_5 = arith.constant 0 : index
    %c0_6 = arith.constant 0 : index
    %9 = vector.load %arg4[%c0_5, %c0_6] : memref<1x16xf32, #tpu.memory_space<vmem>>, vector<1x16xf32>
    tpu.vector_store %arg4[%c0_5, %c0_6], %8 {strides = array<i32>} : memref<1x16xf32, #tpu.memory_space<vmem>>, vector<1x16xf32>,
    %c0_i32_7 = arith.constant 0 : i32
    %10 = arith.cmpi eq, %arg1, %c0_i32_7 : i32
    %11 = arith.extui %10 : i1 to i32
    %c0_i32_8 = arith.constant 0 : i32
    %12 = arith.cmpi ne, %11, %c0_i32_8 : i32
    scf.if %12 {
      %c0_9 = arith.constant 0 : index
      %c0_10 = arith.constant 0 : index
      %13 = vector.load %arg4[%c0_9, %c0_10] : memref<1x16xf32, #tpu.memory_space<vmem>>, vector<1x16xf32>
      %cst_11 = arith.constant 2.500000e-02 : f32
      %14 = vector.broadcast %cst_11 : f32 to vector<1x16xf32>
      %15 = arith.mulf %13, %14 : vector<1x16xf32>
      %c0_12 = arith.constant 0 : index
      %c0_13 = arith.constant 0 : index
      %c0_14 = arith.constant 0 : index
      %16 = vector.load %arg3[%c0_12, %c0_13, %c0_14] : memref<1x1x16xf32, #tpu.memory_space<vmem>>, vector<1x1x16xf32>
      %17 = vector.shape_cast %16 : vector<1x1x16xf32> to vector<1x16xf32>
      %18 = vector.shape_cast %15 : vector<1x16xf32> to vector<1x1x16xf32>
      tpu.vector_store %arg3[%c0_12, %c0_13, %c0_14], %18 {strides = array<i32>} : memref<1x1x16xf32, #tpu.memory_space<vmem>>, vector<1x1x16xf32>,
    } else {
    }
    return
  }
  func.func @transform_0(%arg0: i32, %arg1: i32) -> (i32, i32, i32) {
    %c0_i32 = arith.constant 0 : i32
    %c0_i32_0 = arith.constant 0 : i32
    return %arg0, %arg1, %c0_i32 : i32, i32, i32
  }
  func.func @transform_1(%arg0: i32, %arg1: i32) -> (i32, i32, i32) {
    %c0_i32 = arith.constant 0 : i32
    %c0_i32_0 = arith.constant 0 : i32
    %c0_i32_1 = arith.constant 0 : i32
    return %arg0, %c0_i32, %c0_i32_0 : i32, i32, i32
  }
}

</mosaic_0001>

<llo_original>
// kernel: tpu_custom_call.1
$region0: #{tpu_custom_call.1}
  #allocation0 [shape = 'u32[]', space=smem, size = 0x4, offset = 0x4, fixed_abs, tag = 'smem constant byte address 0x4 - core index']
  #allocation1 [shape = 'u32[144,128]{1,0:T(1,128)}', space=vmem, size = 0x12000, scoped, tag = 'internal scratch']
  #allocation2 [shape = 'f32[1,16]{1,0:T(1,128)}', space=vmem, size = 0x200, scoped, tag = 'scratch operand']
  %s0 = inlined_call_operand.vmem [shape: f32[2,40,16], index: 0, kind: input, shape index: {}]
  %s1 = inlined_call_operand.hbm [shape: f32[2,1,16], index: 1, kind: output, shape index: {}]
  %s2 = sld [smem:[#allocation0]]
  $region45: #{tpu_custom_call.1} parent=0
    _
  %s4 = ssub.s32 1, %s2
  %s5 = scalar_select 0, %s4, %s2
  $region1: #{tpu_custom_call.1} parent=0
    #allocation3 [shape = 'u8[1024]{0}', space=vmem, size = 0x400, scoped, tag = 'output window, operand 0']
    #allocation4 [shape = 's32[2]{0}', space=sflag, size = 0x8, scoped, tag = 'scoped memory for tpu_custom_call.1']
    %6 = vsyncpa [#allocation4], 0
    %s7 = scalar_lea.sflag [#allocation4], 1
    %8 = vsyncpa %s7, 0
    loop: start=0, step=1, limit=4
    $region2: #{tpu_custom_call.1} parent=1 // loop_pre_header
      _
    $region3: #{tpu_custom_call.1} parent=1 // loop_header
      %s10 = sphi 0, %s14
      %p11 = scmp.ge.s32.totalorder %s10, 4
      %s17 = sphi 0, %s29
      %s18 = sphi 0, %s25
      %s19 = sphi 0, %s17
      %s20 = sphi 0, %s18
      %s21 = sphi 0, %s19
      %s22 = sphi 0, %s20
      %s34 = sphi 0, %s36
      %s37 = sphi 0, %s34
      %s38 = sphi 0, %s37
      %s54 = sphi 0, %s38
      %s60 = sphi 0, %s62
      %s63 = sphi 0, %s60
      %s64 = sphi 0, %s63
      %s80 = sphi 0, %s64
    $region4: #{tpu_custom_call.1} parent=1 // loop_header_branch
      %13 = sbr.rel (%p11) target = $region8
    $region5: #{tpu_custom_call.1} parent=1 // loop_body
      %s15 = ssub.s32 %s10, 1
      %s16 = ssub.s32 %s10, 2
      %s23 = sadd.s32 1, %s18
      %p24 = scmp.ge.s32.totalorder %s23, 1
      %s25 = scalar_select %p24, 0, %s23
      %s26 = sadd.s32 1, %s17
      %s27 = scalar_select %p24, %s26, %s17
      %p28 = scmp.ge.s32.totalorder %s27, 2
      %s29 = scalar_select %p28, 0, %s27
      %s30 = ssub.s32 %s17, %s29
      %s31 = ssub.s32 %s18, %s25
      %s32 = sor.u32 %s30, %s31
      %p33 = scmp.eq.s32.totalorder %s32, 0
      %s35 = sadd.s32 %s34, 1
      %s36 = scalar_select %p33, %s34, %s35
      %p39 = pneg %p33
      %p40 = scmp.eq.s32.totalorder %s10, 1
      %p41 = por %p39, %p40
      %p42 = scmp.ne.s32.totalorder %s34, %s37
      %p43 = scmp.eq.s32.totalorder %s10, 0
      %p44 = por %p42, %p43
      %p45 = scmp.ne.s32.totalorder %s34, %s37
      %p46 = scmp.eq.s32.totalorder %s15, 1
      %p47 = por %p45, %p46
      %p48 = scmp.ne.s32.totalorder %s37, %s38
      %p49 = scmp.eq.s32.totalorder %s15, 0
      %p50 = por %p48, %p49
      %p51 = scmp.ne.s32.totalorder %s37, %s38
      %p52 = scmp.eq.s32.totalorder %s16, 1
      %p53 = por %p51, %p52
      %p55 = scmp.ne.s32.totalorder %s38, %s54
      %p56 = scmp.eq.s32.totalorder %s16, 0
      %p57 = por %p55, %p56
      %s58 = ssub.s32 %s17, %s29
      %p59 = scmp.eq.s32.totalorder %s58, 0
      %s61 = sadd.s32 %s60, 1
      %s62 = scalar_select %p59, %s60, %s61
      %p65 = pneg %p59
      %p66 = scmp.eq.s32.totalorder %s10, 1
      %p67 = por %p65, %p66
      %p68 = scmp.ne.s32.totalorder %s60, %s63
      %p69 = scmp.eq.s32.totalorder %s10, 0
      %p70 = por %p68, %p69
      %p71 = scmp.ne.s32.totalorder %s60, %s63
      %p72 = scmp.eq.s32.totalorder %s15, 1
      %p73 = por %p71, %p72
      %p74 = scmp.ne.s32.totalorder %s63, %s64
      %p75 = scmp.eq.s32.totalorder %s15, 0
      %p76 = por %p74, %p75
      %p77 = scmp.ne.s32.totalorder %s63, %s64
      %p78 = scmp.eq.s32.totalorder %s16, 1
      %p79 = por %p77, %p78
      %p81 = scmp.ne.s32.totalorder %s64, %s80
      %p82 = scmp.eq.s32.totalorder %s16, 0
      %p83 = por %p81, %p82
      %p84 = scmp.le.s32.totalorder 1, %s10
      %p85 = scmp.lt.s32.totalorder %s10, 3
      %p86 = pnand %p84, %p85
      %p87 = pneg %p86
      // Predicated region
      $region9: #{tpu_custom_call.1} parent=5 // pred_check
        _
      $region10: #{tpu_custom_call.1} parent=5 // pred_check_branch
        %89 = sbr.rel (%p86) target = $region12
      $region11: #{tpu_custom_call.1} parent=5 // pred_region
        %s90 = ssub.s32 %s10, 1
      $region12: #{tpu_custom_call.1} parent=5 // pred_fallthru
        _
      %p91 = scmp.lt.s32.totalorder %s10, 2
      // Predicated region
      $region13: #{tpu_custom_call.1} parent=5 // pred_check
        %p92 = pneg %p91
      $region14: #{tpu_custom_call.1} parent=5 // pred_check_branch
        %94 = sbr.rel (%p92) target = $region16
      $region15: #{tpu_custom_call.1} parent=5 // pred_region
        // Predicated region
        $region17: #{tpu_custom_call.1} parent=15 // pred_check
          %p95 = pneg %p44
        $region18: #{tpu_custom_call.1} parent=15 // pred_check_branch
          %97 = sbr.rel (%p95) target = $region20
        $region19: #{tpu_custom_call.1} parent=15 // pred_region
          %s98 = smul.u32 5, %s18
          %p99 = scmp.lt.s32.totalorder %s17, 1
          %s100 = scalar_select %p99, %s17, 1
          %p101 = scmp.lt.s32.totalorder %s98, 4
          %s102 = scalar_select %p101, %s98, 4
          %s103 = smul.addr %s100, 5
          %s104 = sadd.s32 %s102, %s103
          %s105 = smul.addr %s104, 8
          %s106 = scalar_lea.vmem %s0, %s105
          %s107 = smul.u32 5, %s18
        $region20: #{tpu_custom_call.1} parent=15 // pred_fallthru
          _
      $region16: #{tpu_custom_call.1} parent=5 // pred_fallthru
        _
      %p108 = scmp.le.s32.totalorder 1, %s10
      %p109 = scmp.lt.s32.totalorder %s10, 3
      %p110 = pnand %p108, %p109
      %p111 = pneg %p110
      // Predicated region
      $region21: #{tpu_custom_call.1} parent=5 // pred_check
        _
      $region22: #{tpu_custom_call.1} parent=5 // pred_check_branch
        %113 = sbr.rel (%p110) target = $region24
      $region23: #{tpu_custom_call.1} parent=5 // pred_region
        %s114 = ssub.s32 %s10, 1
        %s115 = smul.u32 5, %s20
        %p116 = scmp.lt.s32.totalorder %s19, 1
        %s117 = scalar_select %p116, %s19, 1
        %p118 = scmp.lt.s32.totalorder %s115, 4
        %s119 = scalar_select %p118, %s115, 4
        %s120 = smul.addr %s117, 5
        %s121 = sadd.s32 %s119, %s120
        %s122 = smul.addr %s121, 8
        %s123 = scalar_lea.vmem %s0, %s122
        %p124 = pneg %p50
        %p125 = pneg %p47
        %p126 = pneg %p76
        %p127 = pneg %p73
        %s128 = sand.u32 %s63, 1
        %s129 = scalar_lea.sflag [#allocation4], %s128
        %s130 = sand.u32 %s63, 1
        %s131 = scalar_lea.vmem [#allocation3], %s130
        %s132 = smul.u32 5, %s20
        %p133 = scmp.lt.s32.totalorder %s19, 1
        %s134 = scalar_select %p133, %s19, 1
        %p135 = scmp.lt.s32.totalorder %s132, 4
        %s136 = scalar_select %p135, %s132, 4
        %s137 = smul.addr %s134, 5
        %s138 = sadd.s32 %s136, %s137
        %s139 = smul.addr %s138, 8
        %s140 = scalar_lea.vmem %s0, %s139
        %s141 = smul.u32 5, %s20
        %p142 = scmp.eq.s32.totalorder %s20, 0
        // Predicated region
        $region25: #{tpu_custom_call.1} parent=23 // pred_check
          %p143 = pneg %p142
        $region26: #{tpu_custom_call.1} parent=23 // pred_check_branch
          %145 = sbr.rel (%p143) target = $region28
        $region27: #{tpu_custom_call.1} parent=23 // pred_region
          %vm146 = vcmask 122880
          %147 = vst.msk [vmem:[#allocation2] sm:$0x1] %vm146, 0.0
        $region28: #{tpu_custom_call.1} parent=23 // pred_fallthru
          _
        %v148 = vld [vmem:[#allocation2] sm:$0x1]
        %v149 = vld [vmem:[%s140] sm:$0xff]
        %v150 = vld [vmem:[%s140 + $0x8] sm:$0xff]
        %v151 = vld [vmem:[%s140 + $0x10] sm:$0xff]
        %v152 = vld [vmem:[%s140 + $0x18] sm:$0xff]
        %v153 = vld [vmem:[%s140 + $0x20] sm:$0xff]
        %vm154 = vcmask 130048
        %v155 = vsel %vm154, %v149, 0.0
        %v156 = vsel %vm154, %v150, 0.0
        %v157 = vadd.f32 %v155, %v156
        %v158 = vsel %vm154, %v151, 0.0
        %v159 = vadd.f32 %v157, %v158
        %v160 = vsel %vm154, %v152, 0.0
        %v161 = vadd.f32 %v159, %v160
        %v162 = vsel %vm154, %v153, 0.0
        %v163 = vadd.f32 %v161, %v162
        %v164 = vrot.slane %v163, 4
        %v165 = vadd.f32 %v163, %v164
        %v166 = vrot.slane %v165, 2
        %v167 = vadd.f32 %v165, %v166
        %v168 = vrot.slane %v167, 1
        %v169 = vadd.f32 %v167, %v168
        %v170 = vadd.f32 %v148, %v169
        %vm171 = vcmask 122880
        %172 = vst.msk [vmem:[#allocation2] sm:$0x1] %vm171, %v170
        // Predicated region
        $region29: #{tpu_custom_call.1} parent=23 // pred_check
          %p173 = pneg %p142
        $region30: #{tpu_custom_call.1} parent=23 // pred_check_branch
          %175 = sbr.rel (%p173) target = $region32
        $region31: #{tpu_custom_call.1} parent=23 // pred_region
          %v176 = vld [vmem:[#allocation2] sm:$0x1]
          %v177 = vmul.f32 %v176, 0.025
          %178 = vst.msk [vmem:[%s131] sm:$0x1] %vm171, %v177
        $region32: #{tpu_custom_call.1} parent=23 // pred_fallthru
          _
        %s179 = sand.u32 %s63, 1
        %s180 = scalar_lea.sflag [#allocation4], %s179
        %s181 = sand.u32 %s63, 1
        %s182 = scalar_lea.vmem [#allocation3], %s181
        // Predicated region
        $region33: #{tpu_custom_call.1} parent=23 // pred_check
          %p183 = pneg %p73
        $region34: #{tpu_custom_call.1} parent=23 // pred_check_branch
          %185 = sbr.rel (%p183) target = $region36
        $region35: #{tpu_custom_call.1} parent=23 // pred_region
          %s187 = ssub.s32 16, 16
          %188 = vsyncadd %s180, %s187
          %s189 = smul.addr %s19, 16
          %s190 = scalar_lea.hbm %s1, %s189
          %s192 = sshll.u32 %s182, 4
          %s193 = int_to_ptr.vmem [resolvable:$true] %s192
          %195 = dma.vmem_to_hbm [thread:$0]  %s193, 16, %s190, %s180
        $region36: #{tpu_custom_call.1} parent=23 // pred_fallthru
          _
      $region24: #{tpu_custom_call.1} parent=5 // pred_fallthru
        _
      %p196 = scmp.le.s32.totalorder 2, %s10
      // Predicated region
      $region37: #{tpu_custom_call.1} parent=5 // pred_check
        %p197 = pneg %p196
      $region38: #{tpu_custom_call.1} parent=5 // pred_check_branch
        %199 = sbr.rel (%p197) target = $region40
      $region39: #{tpu_custom_call.1} parent=5 // pred_region
        %s200 = ssub.s32 %s10, 2
        // Predicated region
        $region41: #{tpu_custom_call.1} parent=39 // pred_check
          %p201 = pneg %p79
        $region42: #{tpu_custom_call.1} parent=39 // pred_check_branch
          %203 = sbr.rel (%p201) target = $region44
        $region43: #{tpu_custom_call.1} parent=39 // pred_region
          %s204 = sand.u32 %s64, 1
          %s205 = scalar_lea.sflag [#allocation4], %s204
          %s206 = sand.u32 %s64, 1
          %s207 = scalar_lea.vmem [#allocation3], %s206
          %208 = dma.done %s205, 16
        $region44: #{tpu_custom_call.1} parent=39 // pred_fallthru
          _
      $region40: #{tpu_custom_call.1} parent=5 // pred_fallthru
        _
    $region6: #{tpu_custom_call.1} parent=1 // loop_footer
      %s14 = sadd.s32 1, %s10
    $region7: #{tpu_custom_call.1} parent=1 // loop_footer_branch
      %9 = sbr.rel target = $region3
    $region8: #{tpu_custom_call.1} parent=1 // loop_exit
      _
    %209 = vsyncpa [#allocation4], 1
    %s210 = scalar_lea.sflag [#allocation4], 1
    %211 = vsyncpa %s210, 1

</llo_original>
